<compile_context>
chip_gen: v6e
topology: v6e:2x2x1
jax: 0.10.0
libtpu: 0.0.40
codegen_flags: <defaults>
</compile_context>

<pallas_src>
import functools

import jax
import jax.numpy as jnp
from jax.experimental import pallas as pl
from jax.experimental.pallas import tpu as pltpu


def _round_up(x, m):
    return ((x + m - 1) // m) * m


@functools.lru_cache(maxsize=None)
def _roll_matches_numpy():
    """Probe pltpu.roll's rotation direction once on the active backend."""
    def probe(x_ref, o_ref):
        o_ref[...] = pltpu.roll(x_ref[...], shift=1, axis=0)

    x = jnp.broadcast_to(jnp.arange(8, dtype=jnp.float32)[:, None], (8, 128))
    y = pl.pallas_call(
        probe, out_shape=jax.ShapeDtypeStruct((8, 128), jnp.float32))(x)
    return bool(y[0, 0] == 7.0)


# ----------------------------------------------------------------------------
# Fused kernel: layer1+relu -> (conv + folded-BN + relu) x n_mid -> +residual
# -> last conv.  Activations are "padded-flat" (rows, C): pixel (h, w) of
# image b sits at flat row b*Hp*Wp + h*Wp + w; rows with w >= W or h >= H are
# kept at zero (mask) so circular shifts reproduce the conv's zero padding.
# ----------------------------------------------------------------------------
def _snet_fused_kernel(x_ref, mask_ref, w1_ref, wmid_ref, bmid_ref,
                       wlast_ref, out_ref, *, Wp, num_mid, feats, cout_pad,
                       compute_dtype, roll_numpy):
    f32 = jnp.float32

    def read_shift(v, delta):
        # result[p] = v[(p + delta) % rows] along the flat (sublane) axis.
        n = v.shape[0]
        d = delta % n
        if d == 0:
            return v
        s = (n - d) if roll_numpy else d
        return pltpu.roll(v, shift=s, axis=0)

    def cat_dy(x):
        # (rows, Cin) -> (rows, 3*Cin); lane block dy holds x[p + (dy-1)*Wp].
        # +-Wp is a multiple of 8 -> packed-bf16-friendly sublane shift.
        return jnp.concatenate(
            [read_shift(x, -Wp), x, read_shift(x, Wp)], axis=-1)

    def conv(xin, wbig, c):
        # One wide MXU matmul; lane block dx of y holds that dx-tap's partial
        # conv, realigned with +-1 shifts of the f32 output and summed:
        #   out[p] = y[p-1, dx=0] + y[p, dx=1] + y[p+1, dx=2]
        y = jnp.dot(cat_dy(xin), wbig, preferred_element_type=f32)
        return (read_shift(y[:, 0:c], -1)
                + y[:, c:2 * c]
                + read_shift(y[:, 2 * c:3 * c], 1))

    mask = mask_ref[...]                       # (rows, 1) f32; 1 at valid px

    def finish(act_f32):
        # zero padding/garbage rows and drop to the resident compute dtype
        return (act_f32 * mask).astype(compute_dtype)

    # ---- layer 1: conv(channels -> features) + ReLU (no bias) --------------
    x = finish(jnp.maximum(conv(x_ref[0], w1_ref[...], feats), 0.0))
    residual = x

    # ---- middle layers: conv + folded-BN bias + ReLU ------------------------
    for layer in range(num_mid):
        acc = conv(x, wmid_ref[layer], feats)
        x = finish(jnp.maximum(acc + bmid_ref[layer], 0.0))

    # ---- residual add (stays in VMEM) + last conv ---------------------------
    out = conv(x + residual, wlast_ref[...], cout_pad)
    out_ref[0] = out.astype(out_ref.dtype)


# ----------------------------------------------------------------------------
# Wrapper: NCHW in / NCHW out, like the PyTorch module.
# ----------------------------------------------------------------------------
def snet_mean_forward(x_nchw, params, *, compute_dtype=jnp.float32):
    N, C, H, W = x_nchw.shape
    feats = params['layer1_w'].shape[-1]
    cout = params['last_w'].shape[-1]
    num_mid = len(params['dncnn'])

    Wp = _round_up(W + 2, 8)      # padded width (multiple of 8 sublanes)
    Hp = H + 2
    L = Hp * Wp
    assert Wp >= W + 1 and Hp >= H + 1, "roll wraps must land in padding"
    cin_p = _round_up(C, 8)
    cout_p = _round_up(cout, 8)

    # Batch blocking: stack B_blk images along the flat axis per grid step so
    # small images still present a decent matmul M dimension.
    B_blk = max(1, min(N, 2048 // L))
    num_blocks = -(-N // B_blk)
    N_pad = num_blocks * B_blk
    rows = B_blk * L

    # ---- input prep: NCHW -> NHWC, zero-pad ring/channels/batch, flatten ---
    x = jnp.transpose(x_nchw, (0, 2, 3, 1))                      # NHWC
    xp = jnp.pad(x, ((0, N_pad - N), (0, Hp - H), (0, Wp - W),
                     (0, cin_p - C)))
    xflat = xp.reshape(num_blocks, rows, cin_p).astype(compute_dtype)

    # Validity mask of conv-output positions, tiled per stacked image.
    p = jnp.arange(L, dtype=jnp.int32)
    valid = ((p % Wp) < W) & ((p // Wp) < H)
    mask = jnp.tile(valid.astype(jnp.float32), B_blk).reshape(rows, 1)

    # ---- weights: fold BN scale; rows grouped (dy, cin), cols (dx, cout) ---
    def fold(w):   # (3, 3, ci, co) -> (3*ci, 3*co)
        kh, kw, ci, co = w.shape
        return jnp.transpose(w, (0, 2, 1, 3)).reshape(kh * ci, kw * co)

    w1 = fold(jnp.pad(params['layer1_w'],
                      ((0, 0), (0, 0), (0, cin_p - C), (0, 0)))
              ).astype(compute_dtype)                            # (3*cin_p, 3F)
    wmid = jnp.stack([fold(lp['w'] * lp['scale'][None, None, None, :])
                      for lp in params['dncnn']]).astype(compute_dtype)
    bmid = jnp.stack([lp['bias'].reshape(1, feats)
                      for lp in params['dncnn']]).astype(jnp.float32)
    wlast = fold(jnp.pad(params['last_w'],
                         ((0, 0), (0, 0), (0, 0), (0, cout_p - cout)))
                 ).astype(compute_dtype)                         # (3F, 3*cout_p)

    kernel = functools.partial(
        _snet_fused_kernel, Wp=Wp, num_mid=num_mid, feats=feats,
        cout_pad=cout_p, compute_dtype=compute_dtype,
        roll_numpy=_roll_matches_numpy())

    itemsize = xflat.dtype.itemsize
    flops = 2 * N_pad * L * (3 * cin_p * 3 * feats
                             + num_mid * (3 * feats) ** 2
                             + 3 * feats * 3 * cout_p)
    bytes_accessed = (xflat.size * itemsize + mask.size * 4
                      + (w1.size + wmid.size + wlast.size) * itemsize
                      + bmid.size * 4 + num_blocks * rows * cout_p * 4)

    out_flat = pl.pallas_call(
        kernel,
        out_shape=jax.ShapeDtypeStruct((num_blocks, rows, cout_p),
                                       jnp.float32),
        grid=(num_blocks,),
        in_specs=[
            pl.BlockSpec((1, rows, cin_p), lambda n: (n, 0, 0)),
            pl.BlockSpec((rows, 1), lambda n: (0, 0)),
            pl.BlockSpec((3 * cin_p, 3 * feats), lambda n: (0, 0)),
            pl.BlockSpec((num_mid, 3 * feats, 3 * feats),
                         lambda n: (0, 0, 0)),
            pl.BlockSpec((num_mid, 1, feats), lambda n: (0, 0, 0)),
            pl.BlockSpec((3 * feats, 3 * cout_p), lambda n: (0, 0)),
        ],
        out_specs=pl.BlockSpec((1, rows, cout_p), lambda n: (n, 0, 0)),
        compiler_params=pltpu.CompilerParams(
            dimension_semantics=("parallel",),
            vmem_limit_bytes=64 * 1024 * 1024),
        cost_estimate=pl.CostEstimate(flops=flops, transcendentals=0,
                                      bytes_accessed=bytes_accessed),
    )(xflat, mask, w1, wmid, bmid, wlast)

    out = out_flat.reshape(N_pad, Hp, Wp, cout_p)[:N, :H, :W, :cout]
    return jnp.transpose(out, (0, 3, 1, 2))                     # NCHW


# ----------------------------------------------------------------------------
# Parameter construction (deterministic, mimics the module shapes)
# ----------------------------------------------------------------------------
def init_params(key, channels=3, num_of_layers=5, features=64):
    eps = 1e-5
    n_mid = num_of_layers - 2
    keys = jax.random.split(key, 2 + 4 * n_mid)
    k = iter(keys)

    def conv_w(key, cin, cout):
        fan_in = cin * 9
        return (jax.random.normal(key, (3, 3, cin, cout), jnp.float32)
                * (1.0 / jnp.sqrt(fan_in)))

    params = {
        'layer1_w': conv_w(next(k), channels, features),
        'dncnn': [],
    }
    for _ in range(n_mid):
        w = conv_w(next(k), features, features)
        gamma = 1.0 + 0.1 * jax.random.normal(next(k), (features,), jnp.float32)
        beta = 0.1 * jax.random.normal(next(k), (features,), jnp.float32)
        r_mean = 0.05 * jax.random.normal(next(k), (features,), jnp.float32)
        r_var = jnp.ones((features,), jnp.float32)
        scale = gamma / jnp.sqrt(r_var + eps)
        bias = beta - r_mean * scale
        params['dncnn'].append({'w': w, 'scale': scale, 'bias': bias})
    params['last_w'] = conv_w(keys[-1], features, 3)
    return params


# ----------------------------------------------------------------------------
# Pure-JAX reference (for correctness check)
# ----------------------------------------------------------------------------
def _ref_conv(x, w):
    return jax.lax.conv_general_dilated(
        x, w, window_strides=(1, 1), padding=((1, 1), (1, 1)),
        dimension_numbers=('NHWC', 'HWIO', 'NHWC'))


def snet_mean_ref(x_nchw, params):
    x = jnp.transpose(x_nchw, (0, 2, 3, 1))
    x = jax.nn.relu(_ref_conv(x, params['layer1_w']))
    residual = x
    out = x
    for p in params['dncnn']:
        out = jax.nn.relu(_ref_conv(out, p['w']) * p['scale'] + p['bias'])
    out = _ref_conv(out + residual, params['last_w'])
    return jnp.transpose(out, (0, 3, 1, 2))


if __name__ == "__main__":
    key = jax.random.PRNGKey(0)
    k_param, k_x = jax.random.split(key)

    params = init_params(k_param, channels=3, num_of_layers=5, features=64)
    x = jax.random.normal(k_x, (2, 3, 16, 16), jnp.float32)   # NCHW input

    ref = jax.block_until_ready(snet_mean_ref(x, params))

    # f32 path: tight check against the XLA reference.
    out = jax.block_until_ready(
        snet_mean_forward(x, params, compute_dtype=jnp.float32))
    assert out.shape == (2, 3, 16, 16), out.shape
    assert jnp.allclose(out, ref, rtol=1e-4, atol=1e-4), (
        float(jnp.max(jnp.abs(out - ref))))

    # bf16 MXU path (bf16-resident activations, f32 accum/epilogue): loose.
    out_bf16 = jax.block_until_ready(
        snet_mean_forward(x, params, compute_dtype=jnp.bfloat16))
    assert float(jnp.max(jnp.abs(out_bf16 - ref))) < 1e-1, (
        float(jnp.max(jnp.abs(out_bf16 - ref))))

    print("KERNEL_OK")
</pallas_src>

<mosaic_0001>
module attributes {stable_mosaic.version = 11 : i64} {
  func.func @probe(%arg0: memref<8x128xf32, #tpu.memory_space<vmem>>, %arg1: memref<8x128xf32, #tpu.memory_space<vmem>>) attributes {dimension_semantics = [], scalar_prefetch = 0 : i64, scratch_operands = 0 : i64, tpu.core_type = #tpu.core_type<tc>} {
    %c0 = arith.constant 0 : index
    %c0_0 = arith.constant 0 : index
    %0 = vector.load %arg0[%c0, %c0_0] : memref<8x128xf32, #tpu.memory_space<vmem>>, vector<8x128xf32>
    %c1_i32 = arith.constant 1 : i32
    %1 = tpu.dynamic_rotate %0 by %c1_i32 dim 0 : vector<8x128xf32>, i32 -> vector<8x128xf32>
    %c0_1 = arith.constant 0 : index
    %c0_2 = arith.constant 0 : index
    %2 = vector.load %arg1[%c0_1, %c0_2] : memref<8x128xf32, #tpu.memory_space<vmem>>, vector<8x128xf32>
    tpu.vector_store %arg1[%c0_1, %c0_2], %1 {strides = array<i32>} : memref<8x128xf32, #tpu.memory_space<vmem>>, vector<8x128xf32>,
    return
  }
}

</mosaic_0001>

<llo_original>
// kernel: tpu_custom_call.1
$region0: #{tpu_custom_call.1}
  #allocation0 [shape = 'u32[]', space=smem, size = 0x4, offset = 0x4, fixed_abs, tag = 'smem constant byte address 0x4 - core index']
  #allocation1 [shape = 'u32[144,128]{1,0:T(1,128)}', space=vmem, size = 0x12000, scoped, tag = 'internal scratch']
  %s0 = inlined_call_operand.hbm [shape: f32[8,128], index: 0, kind: input, shape index: {}]
  %s1 = inlined_call_operand.hbm [shape: f32[8,128], index: 1, kind: output, shape index: {}]
  %s2 = sld [smem:[#allocation0]]
  $region18: #{tpu_custom_call.1} parent=0
    _
  %s4 = ssub.s32 1, %s2
  %s5 = scalar_select 0, %s4, %s2
  $region1: #{tpu_custom_call.1} parent=0
    #allocation2 [shape = 'u8[4096]{0}', space=vmem, size = 0x1000, scoped, tag = 'input window, operand 0, single buffered']
    #allocation3 [shape = 's32[1]{0}', space=sflag, size = 0x4, scoped, tag = 'scoped memory for tpu_custom_call.1']
    #allocation4 [shape = 's32[1]{0}', space=sflag, size = 0x4, scoped, tag = 'scoped memory for tpu_custom_call.1']
    #allocation5 [shape = 'u8[4096]{0}', space=vmem, size = 0x1000, scoped, tag = 'output window, operand 0, single buffered']
    %6 = vsyncpa [#allocation3], 0
    %7 = vsyncpa [#allocation4], 0
    // Predicated region
    $region2: #{tpu_custom_call.1} parent=1 // pred_check
      _
    $region3: #{tpu_custom_call.1} parent=1 // pred_check_branch
      %9 = sbr.rel (0) target = $region5
    $region4: #{tpu_custom_call.1} parent=1 // pred_region
      %s11 = ssub.s32 128, 128
      %12 = vsyncadd [#allocation3], %s11
      %s14 = sshll.u32 [#allocation2], 4
      %s15 = int_to_ptr.vmem [resolvable:$true] %s14
      %17 = dma.hbm_to_vmem [thread:$0]  %s0, 128, %s15, [#allocation3]
    $region5: #{tpu_custom_call.1} parent=1 // pred_fallthru
      _
    // Predicated region
    $region6: #{tpu_custom_call.1} parent=1 // pred_check
      _
    $region7: #{tpu_custom_call.1} parent=1 // pred_check_branch
      %19 = sbr.rel (0) target = $region9
    $region8: #{tpu_custom_call.1} parent=1 // pred_region
      %20 = dma.done [#allocation3], 128
    $region9: #{tpu_custom_call.1} parent=1 // pred_fallthru
      _
    %v21 = vld [vmem:[#allocation2] sm:$0xff]
    %v22 = vrot.slane %v21, 7
    %23 = vst [vmem:[#allocation5] sm:$0xff] %v22
    // Predicated region
    $region10: #{tpu_custom_call.1} parent=1 // pred_check
      _
    $region11: #{tpu_custom_call.1} parent=1 // pred_check_branch
      %25 = sbr.rel (0) target = $region13
    $region12: #{tpu_custom_call.1} parent=1 // pred_region
      %s27 = ssub.s32 128, 128
      %28 = vsyncadd [#allocation4], %s27
      %s30 = sshll.u32 [#allocation5], 4
      %s31 = int_to_ptr.vmem [resolvable:$true] %s30
      %33 = dma.vmem_to_hbm [thread:$0]  %s31, 128, %s1, [#allocation4]
    $region13: #{tpu_custom_call.1} parent=1 // pred_fallthru
      _
    // Predicated region
    $region14: #{tpu_custom_call.1} parent=1 // pred_check
      _
    $region15: #{tpu_custom_call.1} parent=1 // pred_check_branch
      %35 = sbr.rel (0) target = $region17
    $region16: #{tpu_custom_call.1} parent=1 // pred_region
      %36 = dma.done [#allocation4], 128
    $region17: #{tpu_custom_call.1} parent=1 // pred_fallthru
      _
    %37 = vsyncpa [#allocation3], 1
    %38 = vsyncpa [#allocation4], 1

</llo_original>
